<compile_context>
chip_gen: v7x
topology: tpu7x:2x2x1
jax: 0.10.0
libtpu: 0.0.40
codegen_flags: <defaults>
</compile_context>

<pallas_src>
import functools

import jax
import jax.numpy as jnp
from jax.experimental import pallas as pl
from jax.experimental.pallas import tpu as pltpu


def _make_divisible(v, divisor=8, min_value=None):
    if min_value is None:
        min_value = divisor
    new_v = max(min_value, int(v + divisor / 2) // divisor * divisor)
    if new_v < 0.9 * v:
        new_v += divisor
    return new_v


def _tiny_fc(x, w_ref, b_ref):
    """x: (Bt, K) f32; w_ref: (K, N); b_ref: (1, N).

    For tiny operands the MXU matmul is pure push/pop latency on the serial
    critical path of each grid step, so do it on the VPU (broadcast-mul +
    sublane reduce).  Fall back to the MXU for larger FCs.
    """
    w = w_ref[...].astype(jnp.float32)
    b = b_ref[...].astype(jnp.float32)
    bt, k = x.shape
    n = w.shape[1]
    if bt * k * n <= 32 * 1024:
        return jnp.sum(x[:, :, None] * w[None, :, :], axis=1) + b
    return jnp.dot(x, w, preferred_element_type=jnp.float32) + b


def _se_kernel(x_ref, w1_ref, b1_ref, w2_ref, b2_ref, o_ref, *, true_hw):
    # x_ref: (Bt, C, HW_pad) block — HW on lanes (lane-dense), C on sublanes.
    x = x_ref[...]

    # Global average pool over spatial positions: f32 accumulation only,
    # no full-block f32 copy materialized.
    pooled = jnp.sum(x, axis=-1, dtype=jnp.float32) * (1.0 / true_hw)   # (Bt, C)

    # 1x1 conv #1 + ReLU, then 1x1 conv #2 + HardSigmoid (f32 on the tiny path).
    h = jnp.maximum(_tiny_fc(pooled, w1_ref, b1_ref), 0.0)              # (Bt, hidden)
    z = _tiny_fc(h, w2_ref, b2_ref)                                     # (Bt, C)
    y = jnp.clip(z + 3.0, 0.0, 6.0) * (1.0 / 6.0)                       # (Bt, C)

    # Per-(b, c) scale broadcast over the HW lane axis, in the I/O dtype.
    o_ref[...] = x * y.astype(o_ref.dtype)[:, :, None]


def _pick_batch_tile(B, per_batch_bytes, budget_bytes=6 << 20, min_split_bytes=1 << 20):
    """Rows-per-grid-step.

    * Largest bt whose block fits the per-block budget (double-buffering of
      the x and out blocks makes the resident footprint ~4x this).
    * Only prefer >= 2 grid steps (to feed both TensorCores on 2-TC chips)
      when each resulting block stays >= min_split_bytes; on 1-TC chips or
      tiny inputs a single large step wins.
    * Non-divisor bt is fine: the caller uses pl.cdiv and the last block may
      be partial (batches are independent, padded rows are discarded).
    """
    max_bt = max(1, int(budget_bytes // max(per_batch_bytes, 1)))
    bt = min(B, max_bt)
    if bt == B and B >= 2:
        half = pl.cdiv(B, 2)
        if half * per_batch_bytes >= min_split_bytes:
            bt = half
    return bt


def se_layer_pallas(x_nchw, w1, b1, w2, b2):
    """x_nchw: (B, C, H, W); w1: (C, hidden); b1: (1, hidden); w2: (hidden, C); b2: (1, C)."""
    B, C, H, W = x_nchw.shape
    HW = H * W
    hidden = w1.shape[1]

    # Contiguous view NCHW -> (B, C, HW); no transpose, no extra HBM traffic.
    x = x_nchw.reshape(B, C, HW)

    # Lane-dense store path: pad HW up to a multiple of 128 when needed
    # (real PP-LCNet stages: 49, 196, ...).  Padded lanes are zeros, so the
    # pooled sum divided by the *true* HW stays exact.
    HW_pad = ((HW + 127) // 128) * 128
    if HW_pad != HW:
        x = jnp.pad(x, ((0, 0), (0, 0), (0, HW_pad - HW)))

    itemsize = x.dtype.itemsize
    per_batch_bytes = C * HW_pad * itemsize
    bt = _pick_batch_tile(B, per_batch_bytes)
    grid = (pl.cdiv(B, bt),)

    block_bytes = bt * per_batch_bytes
    weight_bytes = sum(int(a.size) * a.dtype.itemsize for a in (w1, b1, w2, b2))
    # Pallas double-buffers the x block and the out block => ~4x block resident.
    # Cap at 48 MiB so the request always fits v7x's 64 MiB physical VMEM.
    vmem_limit = int(min(48 << 20,
                         max(32 << 20, 4 * block_bytes + 2 * weight_bytes + (4 << 20))))

    cost = pl.CostEstimate(
        flops=4 * B * C * hidden + B * C * HW_pad,            # two tiny FCs + final scale
        transcendentals=0,
        bytes_accessed=2 * B * C * HW_pad * itemsize + 2 * weight_bytes,
    )

    out = pl.pallas_call(
        functools.partial(_se_kernel, true_hw=HW),
        out_shape=jax.ShapeDtypeStruct((B, C, HW_pad), x.dtype),
        grid_spec=pltpu.PrefetchScalarGridSpec(
            num_scalar_prefetch=0,
            grid=grid,
            in_specs=[
                pl.BlockSpec((bt, C, HW_pad), lambda i: (i, 0, 0)),   # x block
                pl.BlockSpec((C, hidden), lambda i: (0, 0)),          # W1^T (resident)
                pl.BlockSpec((1, hidden), lambda i: (0, 0)),          # b1   (resident)
                pl.BlockSpec((hidden, C), lambda i: (0, 0)),          # W2^T (resident)
                pl.BlockSpec((1, C), lambda i: (0, 0)),               # b2   (resident)
            ],
            out_specs=pl.BlockSpec((bt, C, HW_pad), lambda i: (i, 0, 0)),
        ),
        compiler_params=pltpu.CompilerParams(
            dimension_semantics=("parallel",),
            vmem_limit_bytes=vmem_limit),
        cost_estimate=cost,
    )(x, w1, b1, w2, b2)

    if HW_pad != HW:
        out = out[:, :, :HW]
    return out.reshape(B, C, H, W)


def se_layer_ref(x_nchw, w1, b1, w2, b2):
    """Pure-JAX reference mirroring the PyTorch forward."""
    pooled = jnp.mean(x_nchw.astype(jnp.float32), axis=(2, 3))   # (B, C)
    h = jnp.maximum(pooled @ w1 + b1, 0.0)                       # (B, hidden)
    z = h @ w2 + b2                                              # (B, C)
    y = jnp.clip(z + 3.0, 0.0, 6.0) / 6.0
    return (x_nchw.astype(jnp.float32) * y[:, :, None, None]).astype(x_nchw.dtype)


if __name__ == "__main__":
    # Module config: SELayer(inp=16, oup=16, reduction=4) -> hidden = _make_divisible(4) = 8
    inp = oup = 16
    reduction = 4
    hidden = _make_divisible(inp // reduction)

    key = jax.random.PRNGKey(0)
    kx, k1, k2, k3, k4, kx2 = jax.random.split(key, 6)

    # Conv2d weights (out, in, 1, 1) squeezed + transposed so the kernel computes
    # row @ W^T as a plain matmul.
    w1_torch = jax.random.normal(k1, (hidden, oup), dtype=jnp.float32) * 0.1   # Conv2d(oup->hidden)
    b1_torch = jax.random.normal(k2, (hidden,), dtype=jnp.float32) * 0.1
    w2_torch = jax.random.normal(k3, (oup, hidden), dtype=jnp.float32) * 0.1   # Conv2d(hidden->oup)
    b2_torch = jax.random.normal(k4, (oup,), dtype=jnp.float32) * 0.1

    w1 = w1_torch.T                    # (C, hidden)
    b1 = b1_torch.reshape(1, hidden)   # (1, hidden)
    w2 = w2_torch.T                    # (hidden, C)
    b2 = b2_torch.reshape(1, oup)      # (1, C)

    # Test 1: lane-aligned spatial (HW = 256).
    B, C, H, W = 2, oup, 16, 16
    x = jax.random.normal(kx, (B, C, H, W), dtype=jnp.float32)
    out = jax.block_until_ready(se_layer_pallas(x, w1, b1, w2, b2))
    ref = se_layer_ref(x, w1, b1, w2, b2)
    assert jnp.allclose(out, ref, atol=1e-5, rtol=1e-5), "mismatch vs reference (HW=256)"

    # Test 2: non-128-multiple spatial (HW = 49) exercises the lane-padding path.
    x2 = jax.random.normal(kx2, (B, C, 7, 7), dtype=jnp.float32)
    out2 = jax.block_until_ready(se_layer_pallas(x2, w1, b1, w2, b2))
    ref2 = se_layer_ref(x2, w1, b1, w2, b2)
    assert jnp.allclose(out2, ref2, atol=1e-5, rtol=1e-5), "mismatch vs reference (HW=49)"

    print("KERNEL_OK")
</pallas_src>

<mosaic_0001>
module attributes {stable_mosaic.version = 11 : i64} {
  func.func @_se_kernel(%arg0: i32, %arg1: memref<2x16x256xf32, #tpu.memory_space<vmem>>, %arg2: memref<16x8xf32, #tpu.memory_space<vmem>>, %arg3: memref<1x8xf32, #tpu.memory_space<vmem>>, %arg4: memref<8x16xf32, #tpu.memory_space<vmem>>, %arg5: memref<1x16xf32, #tpu.memory_space<vmem>>, %arg6: memref<2x16x256xf32, #tpu.memory_space<vmem>>) attributes {dimension_semantics = [#tpu.dimension_semantics<parallel>], iteration_bounds = array<i64: 1>, scalar_prefetch = 0 : i64, scratch_operands = 0 : i64, tpu.core_type = #tpu.core_type<tc>, window_params = [{transform_indices = @transform_0, window_bounds = array<i64: 2, 16, 256>}, {pipeline_mode = #tpu.pipeline_mode<synchronous>, transform_indices = @transform_1, window_bounds = array<i64: 16, 8>}, {pipeline_mode = #tpu.pipeline_mode<synchronous>, transform_indices = @transform_2, window_bounds = array<i64: 1, 8>}, {pipeline_mode = #tpu.pipeline_mode<synchronous>, transform_indices = @transform_3, window_bounds = array<i64: 8, 16>}, {pipeline_mode = #tpu.pipeline_mode<synchronous>, transform_indices = @transform_4, window_bounds = array<i64: 1, 16>}, {transform_indices = @transform_5, window_bounds = array<i64: 2, 16, 256>}]} {
    %c0 = arith.constant 0 : index
    %c0_0 = arith.constant 0 : index
    %c0_1 = arith.constant 0 : index
    %0 = vector.load %arg1[%c0, %c0_0, %c0_1] : memref<2x16x256xf32, #tpu.memory_space<vmem>>, vector<2x16x256xf32>
    %cst = arith.constant dense<0.000000e+00> : vector<2x16xf32>
    %1 = vector.multi_reduction <add>, %0, %cst [2] : vector<2x16x256xf32> to vector<2x16xf32>
    %cst_2 = arith.constant 3.906250e-03 : f32
    %2 = vector.broadcast %cst_2 : f32 to vector<2x16xf32>
    %3 = arith.mulf %1, %2 : vector<2x16xf32>
    %c0_3 = arith.constant 0 : index
    %c0_4 = arith.constant 0 : index
    %4 = vector.load %arg2[%c0_3, %c0_4] : memref<16x8xf32, #tpu.memory_space<vmem>>, vector<16x8xf32>
    %c0_5 = arith.constant 0 : index
    %c0_6 = arith.constant 0 : index
    %5 = vector.load %arg3[%c0_5, %c0_6] : memref<1x8xf32, #tpu.memory_space<vmem>>, vector<1x8xf32>
    %6 = vector.shape_cast %3 : vector<2x16xf32> to vector<2x16x1xf32>
    %7 = vector.shape_cast %4 : vector<16x8xf32> to vector<1x16x8xf32>
    %8 = vector.broadcast %6 : vector<2x16x1xf32> to vector<2x16x8xf32>
    %9 = vector.broadcast %7 : vector<1x16x8xf32> to vector<2x16x8xf32>
    %10 = arith.mulf %8, %9 : vector<2x16x8xf32>
    %cst_7 = arith.constant dense<0.000000e+00> : vector<2x8xf32>
    %11 = vector.multi_reduction <add>, %10, %cst_7 [1] : vector<2x16x8xf32> to vector<2x8xf32>
    %12 = vector.broadcast %5 : vector<1x8xf32> to vector<2x8xf32>
    %13 = arith.addf %11, %12 : vector<2x8xf32>
    %cst_8 = arith.constant 0.000000e+00 : f32
    %14 = vector.broadcast %cst_8 : f32 to vector<2x8xf32>
    %15 = arith.maximumf %13, %14 : vector<2x8xf32>
    %c0_9 = arith.constant 0 : index
    %c0_10 = arith.constant 0 : index
    %16 = vector.load %arg4[%c0_9, %c0_10] : memref<8x16xf32, #tpu.memory_space<vmem>>, vector<8x16xf32>
    %c0_11 = arith.constant 0 : index
    %c0_12 = arith.constant 0 : index
    %17 = vector.load %arg5[%c0_11, %c0_12] : memref<1x16xf32, #tpu.memory_space<vmem>>, vector<1x16xf32>
    %18 = vector.shape_cast %15 : vector<2x8xf32> to vector<2x8x1xf32>
    %19 = vector.shape_cast %16 : vector<8x16xf32> to vector<1x8x16xf32>
    %20 = vector.broadcast %18 : vector<2x8x1xf32> to vector<2x8x16xf32>
    %21 = vector.broadcast %19 : vector<1x8x16xf32> to vector<2x8x16xf32>
    %22 = arith.mulf %20, %21 : vector<2x8x16xf32>
    %cst_13 = arith.constant dense<0.000000e+00> : vector<2x16xf32>
    %23 = vector.multi_reduction <add>, %22, %cst_13 [1] : vector<2x8x16xf32> to vector<2x16xf32>
    %24 = vector.broadcast %17 : vector<1x16xf32> to vector<2x16xf32>
    %25 = arith.addf %23, %24 : vector<2x16xf32>
    %cst_14 = arith.constant 3.000000e+00 : f32
    %26 = vector.broadcast %cst_14 : f32 to vector<2x16xf32>
    %27 = arith.addf %25, %26 : vector<2x16xf32>
    %cst_15 = arith.constant 0.000000e+00 : f32
    %cst_16 = arith.constant 6.000000e+00 : f32
    %28 = vector.broadcast %cst_15 : f32 to vector<2x16xf32>
    %29 = arith.maximumf %28, %27 : vector<2x16xf32>
    %30 = vector.broadcast %cst_16 : f32 to vector<2x16xf32>
    %31 = arith.minimumf %30, %29 : vector<2x16xf32>
    %cst_17 = arith.constant 0.166666672 : f32
    %32 = vector.broadcast %cst_17 : f32 to vector<2x16xf32>
    %33 = arith.mulf %31, %32 : vector<2x16xf32>
    %34 = vector.shape_cast %33 : vector<2x16xf32> to vector<2x16x1xf32>
    %35 = vector.broadcast %34 : vector<2x16x1xf32> to vector<2x16x256xf32>
    %36 = arith.mulf %0, %35 : vector<2x16x256xf32>
    %c0_18 = arith.constant 0 : index
    %c0_19 = arith.constant 0 : index
    %c0_20 = arith.constant 0 : index
    %37 = vector.load %arg6[%c0_18, %c0_19, %c0_20] : memref<2x16x256xf32, #tpu.memory_space<vmem>>, vector<2x16x256xf32>
    tpu.vector_store %arg6[%c0_18, %c0_19, %c0_20], %36 {strides = array<i32>} : memref<2x16x256xf32, #tpu.memory_space<vmem>>, vector<2x16x256xf32>,
    return
  }
  func.func @transform_0(%arg0: i32) -> (i32, i32, i32) {
    %c0_i32 = arith.constant 0 : i32
    %c0_i32_0 = arith.constant 0 : i32
    %c0_i32_1 = arith.constant 0 : i32
    return %arg0, %c0_i32, %c0_i32_0 : i32, i32, i32
  }
  func.func @transform_1(%arg0: i32) -> (i32, i32) {
    %c0_i32 = arith.constant 0 : i32
    %c0_i32_0 = arith.constant 0 : i32
    %c0_i32_1 = arith.constant 0 : i32
    return %c0_i32, %c0_i32_0 : i32, i32
  }
  func.func @transform_2(%arg0: i32) -> (i32, i32) {
    %c0_i32 = arith.constant 0 : i32
    %c0_i32_0 = arith.constant 0 : i32
    %c0_i32_1 = arith.constant 0 : i32
    return %c0_i32, %c0_i32_0 : i32, i32
  }
  func.func @transform_3(%arg0: i32) -> (i32, i32) {
    %c0_i32 = arith.constant 0 : i32
    %c0_i32_0 = arith.constant 0 : i32
    %c0_i32_1 = arith.constant 0 : i32
    return %c0_i32, %c0_i32_0 : i32, i32
  }
  func.func @transform_4(%arg0: i32) -> (i32, i32) {
    %c0_i32 = arith.constant 0 : i32
    %c0_i32_0 = arith.constant 0 : i32
    %c0_i32_1 = arith.constant 0 : i32
    return %c0_i32, %c0_i32_0 : i32, i32
  }
  func.func @transform_5(%arg0: i32) -> (i32, i32, i32) {
    %c0_i32 = arith.constant 0 : i32
    %c0_i32_0 = arith.constant 0 : i32
    %c0_i32_1 = arith.constant 0 : i32
    return %arg0, %c0_i32, %c0_i32_0 : i32, i32, i32
  }
}

</mosaic_0001>

<llo_original>
// kernel: tpu_custom_call.1
$region0: #{tpu_custom_call.1}
  #allocation0 [shape = 'u32[]', space=smem, size = 0x4, offset = 0x4, fixed_abs, tag = 'smem constant byte address 0x4 - core index']
  #allocation1 [shape = 'u32[144,128]{1,0:T(1,128)}', space=vmem, size = 0x12000, scoped, tag = 'internal scratch']
  %s0 = inlined_call_operand.hbm [shape: f32[2,16,256], index: 0, kind: input, shape index: {}]
  %s1 = inlined_call_operand.vmem [shape: f32[16,8], index: 1, kind: input, shape index: {}]
  %s2 = inlined_call_operand.vmem [shape: f32[1,8], index: 2, kind: input, shape index: {}]
  %s3 = inlined_call_operand.vmem [shape: f32[8,16], index: 3, kind: input, shape index: {}]
  %s4 = inlined_call_operand.vmem [shape: f32[1,16], index: 4, kind: input, shape index: {}]
  %s5 = inlined_call_operand.hbm [shape: f32[2,16,256], index: 5, kind: output, shape index: {}]
  %s6 = sld [smem:[#allocation0]]
  $region34: #{tpu_custom_call.1} parent=0
    _
  %s8 = ssub.s32 1, %s6
  %s9 = scalar_select 0, %s8, %s6
  $region1: #{tpu_custom_call.1} parent=0
    #allocation2 [shape = 'u8[32768]{0}', space=vmem, size = 0x8000, scoped, tag = 'input window, operand 0, single buffered']
    #allocation3 [shape = 's32[1]{0}', space=sflag, size = 0x4, scoped, tag = 'scoped memory for tpu_custom_call.1']
    #allocation4 [shape = 's32[1]{0}', space=sflag, size = 0x4, scoped, tag = 'scoped memory for tpu_custom_call.1']
    #allocation5 [shape = 'u8[32768]{0}', space=vmem, size = 0x8000, scoped, tag = 'output window, operand 0, single buffered']
    %10 = vsyncpa [#allocation3], 0
    %11 = vsyncpa [#allocation4], 0
    // Predicated region
    $region2: #{tpu_custom_call.1} parent=1 // pred_check
      _
    $region3: #{tpu_custom_call.1} parent=1 // pred_check_branch
      %13 = sbr.rel (0) target = $region5
    $region4: #{tpu_custom_call.1} parent=1 // pred_region
      %s15 = ssub.s32 1024, 1024
      %16 = vsyncadd [#allocation3], %s15
      %s17 = sshll.u32 [#allocation2], 4
      %s18 = int_to_ptr.vmem [resolvable:$true] %s17
      %23 = dma.hbm_to_vmem [thread:$0]  %s0, 1024, %s18, [#allocation3], 256, 256, 16
    $region5: #{tpu_custom_call.1} parent=1 // pred_fallthru
      _
    // Predicated region
    $region6: #{tpu_custom_call.1} parent=1 // pred_check
      _
    $region7: #{tpu_custom_call.1} parent=1 // pred_check_branch
      %25 = sbr.rel (0) target = $region9
    $region8: #{tpu_custom_call.1} parent=1 // pred_region
      _
    $region9: #{tpu_custom_call.1} parent=1 // pred_fallthru
      _
    // Predicated region
    $region10: #{tpu_custom_call.1} parent=1 // pred_check
      _
    $region11: #{tpu_custom_call.1} parent=1 // pred_check_branch
      %27 = sbr.rel (0) target = $region13
    $region12: #{tpu_custom_call.1} parent=1 // pred_region
      _
    $region13: #{tpu_custom_call.1} parent=1 // pred_fallthru
      _
    // Predicated region
    $region14: #{tpu_custom_call.1} parent=1 // pred_check
      _
    $region15: #{tpu_custom_call.1} parent=1 // pred_check_branch
      %29 = sbr.rel (0) target = $region17
    $region16: #{tpu_custom_call.1} parent=1 // pred_region
      _
    $region17: #{tpu_custom_call.1} parent=1 // pred_fallthru
      _
    // Predicated region
    $region18: #{tpu_custom_call.1} parent=1 // pred_check
      _
    $region19: #{tpu_custom_call.1} parent=1 // pred_check_branch
      %31 = sbr.rel (0) target = $region21
    $region20: #{tpu_custom_call.1} parent=1 // pred_region
      _
    $region21: #{tpu_custom_call.1} parent=1 // pred_fallthru
      _
    // Predicated region
    $region22: #{tpu_custom_call.1} parent=1 // pred_check
      _
    $region23: #{tpu_custom_call.1} parent=1 // pred_check_branch
      %33 = sbr.rel (0) target = $region25
    $region24: #{tpu_custom_call.1} parent=1 // pred_region
      %34 = dma.done [#allocation3], 1024
    $region25: #{tpu_custom_call.1} parent=1 // pred_fallthru
      _
    %v35 = vld [vmem:[#allocation2] sm:$0xff]
    %v36 = vld [vmem:[#allocation2 + $0x8] sm:$0xff]
    %v37 = vld [vmem:[#allocation2 + $0x10] sm:$0xff]
    %v38 = vld [vmem:[#allocation2 + $0x18] sm:$0xff]
    %v39 = vld [vmem:[#allocation2 + $0x20] sm:$0xff]
    %v40 = vld [vmem:[#allocation2 + $0x28] sm:$0xff]
    %v41 = vld [vmem:[#allocation2 + $0x30] sm:$0xff]
    %v42 = vld [vmem:[#allocation2 + $0x38] sm:$0xff]
    %v43 = vadd.f32 %v35, %v36
    %44 = vadd.xlane.f32.xlu0 %v43
    %v45 = vpop.xlane.xlu0 %44
    %v46 = vadd.f32 %v37, %v38
    %47 = vadd.xlane.f32.xlu0 %v46
    %v48 = vpop.xlane.xlu0 %47
    %v49 = vadd.f32 %v39, %v40
    %50 = vadd.xlane.f32.xlu0 %v49
    %v51 = vpop.xlane.xlu0 %50
    %v52 = vadd.f32 %v41, %v42
    %53 = vadd.xlane.f32.xlu0 %v52
    %v54 = vpop.xlane.xlu0 %53
    %v55 = vmul.f32 %v45, 0.00390625
    %v56 = vmul.f32 %v48, 0.00390625
    %v57 = vmul.f32 %v51, 0.00390625
    %v58 = vmul.f32 %v54, 0.00390625
    %v59 = vld [vmem:[%s1] sm:$0xff]
    %v60 = vld [vmem:[%s1 + $0x8] sm:$0xff]
    %v61 = vld [vmem:[%s2] sm:$0x1]
    %v62 = vmul.f32 %v55, %v59
    %v63 = vmul.f32 %v56, %v60
    %v64 = vmul.f32 %v57, %v59
    %v65 = vmul.f32 %v58, %v60
    %vm66 = vcmask 64512
    %v67 = vsel %vm66, %v62, 0.0
    %v68 = vsel %vm66, %v63, 0.0
    %v69 = vadd.f32 %v67, %v68
    %v70 = vrot.slane %v69, 4
    %v71 = vadd.f32 %v69, %v70
    %v72 = vrot.slane %v71, 2
    %v73 = vadd.f32 %v71, %v72
    %v74 = vrot.slane %v73, 1
    %v75 = vadd.f32 %v73, %v74
    %v76 = vsel %vm66, %v64, 0.0
    %v77 = vsel %vm66, %v65, 0.0
    %v78 = vadd.f32 %v76, %v77
    %v79 = vrot.slane %v78, 4
    %v80 = vadd.f32 %v78, %v79
    %v81 = vrot.slane %v80, 2
    %v82 = vadd.f32 %v80, %v81
    %v83 = vrot.slane %v82, 1
    %v84 = vadd.f32 %v82, %v83
    %v86 = vlaneseq
    %v87 = vshrl.u32 %v86, 7
    %v88 = vsub.s32 0, %v87
    %v89 = vrot.slane %v61, %v88
    %v91 = vadd.f32 %v75, %v89
    %v92 = vadd.f32 %v84, %v89
    %v93 = vmax.f32 %v91, 0.0
    %v94 = vmax.f32 %v92, 0.0
    %v95 = vld [vmem:[%s3] sm:$0xff]
    %v96 = vld [vmem:[%s4] sm:$0x1]
    %v97 = vlaneseq
    %v98 = vshrl.u32 %v97, 7
    %v99 = vsub.s32 0, %v98
    %v100 = vrot.slane %v93, %v99
    %102 = vbcast.lane.b32.xlu0 %v100, 256
    %v103 = vpop.permute.xlu0 %102
    %v104 = vlaneseq
    %v105 = vshrl.u32 %v104, 7
    %v106 = vsub.s32 0, %v105
    %v107 = vrot.slane %v94, %v106
    %109 = vbcast.lane.b32.xlu0 %v107, 256
    %v110 = vpop.permute.xlu0 %109
    %v111 = vmul.f32 %v103, %v95
    %v112 = vmul.f32 %v110, %v95
    %vm113 = vcmask 130048
    %v114 = vsel %vm113, %v111, 0.0
    %v115 = vrot.slane %v114, 4
    %v116 = vadd.f32 %v114, %v115
    %v117 = vrot.slane %v116, 2
    %v118 = vadd.f32 %v116, %v117
    %v119 = vrot.slane %v118, 1
    %v120 = vadd.f32 %v118, %v119
    %v121 = vsel %vm113, %v112, 0.0
    %v122 = vrot.slane %v121, 4
    %v123 = vadd.f32 %v121, %v122
    %v124 = vrot.slane %v123, 2
    %v125 = vadd.f32 %v123, %v124
    %v126 = vrot.slane %v125, 1
    %v127 = vadd.f32 %v125, %v126
    %v129 = vlaneseq
    %v130 = vshrl.u32 %v129, 7
    %v131 = vsub.s32 0, %v130
    %v132 = vrot.slane %v96, %v131
    %v134 = vadd.f32 %v120, %v132
    %v135 = vadd.f32 %v127, %v132
    %v136 = vadd.f32 %v134, 3.0
    %v137 = vadd.f32 %v135, 3.0
    %v138 = vmax.f32 %v136, 0.0
    %v139 = vmax.f32 %v137, 0.0
    %v140 = vmin.f32 %v138, 6.0
    %v141 = vmin.f32 %v139, 6.0
    %v142 = vmul.f32 %v140, 0.16666667
    %v143 = vmul.f32 %v141, 0.16666667
    %v144 = vlaneseq
    %v145 = vshrl.u32 %v144, 7
    %v146 = vsub.s32 0, %v145
    %v147 = vrot.slane %v142, %v146
    %149 = vbcast.lane.b32.xlu0 %v147, 256
    %v150 = vpop.permute.xlu0 %149
    %s152 = sor.u32 256, 8
    %153 = vbcast.lane.b32.xlu0 %v147, %s152
    %v154 = vpop.permute.xlu0 %153
    %v155 = vlaneseq
    %v156 = vshrl.u32 %v155, 7
    %v157 = vsub.s32 0, %v156
    %v158 = vrot.slane %v143, %v157
    %160 = vbcast.lane.b32.xlu0 %v158, 256
    %v161 = vpop.permute.xlu0 %160
    %s163 = sor.u32 256, 8
    %164 = vbcast.lane.b32.xlu0 %v158, %s163
    %v165 = vpop.permute.xlu0 %164
    %v166 = vmul.f32 %v35, %v150
    %v167 = vmul.f32 %v36, %v150
    %v168 = vmul.f32 %v37, %v154
    %v169 = vmul.f32 %v38, %v154
    %v170 = vmul.f32 %v39, %v161
    %v171 = vmul.f32 %v40, %v161
    %v172 = vmul.f32 %v41, %v165
    %v173 = vmul.f32 %v42, %v165
    %174 = vst [vmem:[#allocation5] sm:$0xff] %v166
    %175 = vst [vmem:[#allocation5 + $0x8] sm:$0xff] %v167
    %176 = vst [vmem:[#allocation5 + $0x10] sm:$0xff] %v168
    %177 = vst [vmem:[#allocation5 + $0x18] sm:$0xff] %v169
    %178 = vst [vmem:[#allocation5 + $0x20] sm:$0xff] %v170
    %179 = vst [vmem:[#allocation5 + $0x28] sm:$0xff] %v171
    %180 = vst [vmem:[#allocation5 + $0x30] sm:$0xff] %v172
    %181 = vst [vmem:[#allocation5 + $0x38] sm:$0xff] %v173
    // Predicated region
    $region26: #{tpu_custom_call.1} parent=1 // pred_check
      _
    $region27: #{tpu_custom_call.1} parent=1 // pred_check_branch
      %183 = sbr.rel (0) target = $region29
    $region28: #{tpu_custom_call.1} parent=1 // pred_region
      %s185 = ssub.s32 1024, 1024
      %186 = vsyncadd [#allocation4], %s185
      %s187 = sshll.u32 [#allocation5], 4
      %s188 = int_to_ptr.vmem [resolvable:$true] %s187
      %193 = dma.vmem_to_hbm [thread:$0]  %s188, 1024, %s5, [#allocation4], 256, 256, 16
    $region29: #{tpu_custom_call.1} parent=1 // pred_fallthru
      _
    // Predicated region
    $region30: #{tpu_custom_call.1} parent=1 // pred_check
      _
    $region31: #{tpu_custom_call.1} parent=1 // pred_check_branch
      %195 = sbr.rel (0) target = $region33
    $region32: #{tpu_custom_call.1} parent=1 // pred_region
      %196 = dma.done [#allocation4], 1024
    $region33: #{tpu_custom_call.1} parent=1 // pred_fallthru
      _
    %197 = vsyncpa [#allocation3], 1
    %198 = vsyncpa [#allocation4], 1

</llo_original>
